<compile_context>
chip_gen: v6e
topology: v6e:2x2x1
jax: 0.10.0
libtpu: 0.0.40
codegen_flags: <defaults>
</compile_context>

<pallas_src>
import jax
import jax.numpy as jnp
from jax.experimental import pallas as pl
from jax.experimental.pallas import tpu as pltpu

LN_EPS = 1e-5  # PyTorch nn.LayerNorm default


def _qimia_step_kernel(keys_ref, vals_ref, expd_ref, fold_ref, grp_ref, lnm_ref,
                       qk_ref, mvb_ref, wf_ref, bf_ref, out_ref):
    """One grid step == G fused BaseBlocks (LQA + LayerNorm + block linear).

    Shared operands (constant index map, resident in VMEM across steps):
      keys_ref : (B, W)         flattened keys + ones column (+ zero pad), W ~ L*Dk+1
      vals_ref : (B, G*L*Dv)    flattened input values, tiled per fused block
      expd_ref : (K, G*L*Dv)    chunk-prob -> value-lane expansion (0/1), K = G*H*(L+1)
      fold_ref : (G*L*Dv, G*Dv) fold weighted value lanes to head-unshaped output
      grp_ref  : (K, K)         same-(block, head) 0/1 mask for the grouped softmax
      lnm_ref  : (G*Dv, G*Dv)   per-block LayerNorm averaging mask (1/Dv entries)
    Per-step operands (leading step axis selected by the grid):
      qk_ref   : (1, W, K)            learned-query columns (+ bias-token logit row)
      mvb_ref  : (1, K, G*Dv)         bias-token value contribution
      wf_ref   : (1, G*Dv, G*(Dk+Dv)) block-diag LN-folded [w_key | w_val]
      bf_ref   : (1, 1, G*(Dk+Dv))    LN-folded [b_key | b_val]
    Output:
      out_ref  : (1, B, G*(Dk+Dv))    lane-dense packed [key | value] per block
    """
    # Learned-query logits for every (block, head, position) chunk: one matmul.
    logits = jnp.dot(keys_ref[...], qk_ref[0], preferred_element_type=jnp.float32)

    # Grouped softmax over each head's positions with a TRUE per-group max
    # (review fix: a global row max can underflow a whole head's numerators).
    grp = grp_ref[...]
    neg = (grp - 1.0) * 1e30                          # 0 in-group, -1e30 out-of-group
    m = jnp.max(logits[:, None, :] + neg, axis=-1)    # (B, K) per-group max
    ex = jnp.exp(logits - m)
    denom = jnp.dot(ex, grp, preferred_element_type=jnp.float32)
    p = ex / denom                                    # exact divide (review fix)

    # Attention-weighted value sum + multihead_unshape, lane-dense over G*Dv.
    w = jnp.dot(p, expd_ref[...], preferred_element_type=jnp.float32)
    a = jnp.dot(w * vals_ref[...], fold_ref[...], preferred_element_type=jnp.float32)
    a = a + jnp.dot(p, mvb_ref[0], preferred_element_type=jnp.float32)   # bias-token values

    # Per-block LayerNorm (biased variance; affine folded into the projection).
    mean = jnp.dot(a, lnm_ref[...], preferred_element_type=jnp.float32)
    cen = a - mean
    var = jnp.dot(cen * cen, lnm_ref[...], preferred_element_type=jnp.float32)
    a_n = cen * jax.lax.rsqrt(var + LN_EPS)

    # Fused block() projections for all G blocks: one block-diagonal matmul and
    # a single unmasked 128-lane store.
    out_ref[0] = (jnp.dot(a_n, wf_ref[0], preferred_element_type=jnp.float32)
                  + bf_ref[0])


def _block_diag(mats):
    n_r = sum(m.shape[0] for m in mats)
    n_c = sum(m.shape[1] for m in mats)
    out = jnp.zeros((n_r, n_c), mats[0].dtype)
    r = c = 0
    for m in mats:
        out = out.at[r:r + m.shape[0], c:c + m.shape[1]].set(m)
        r += m.shape[0]
        c += m.shape[1]
    return out


def qimia_parallel_forward(keys, values, block_params, n_heads):
    """QIMIA_Parallel.forward(keys, values, aux=None): all blocks, one pallas_call."""
    B, L, Dk = keys.shape
    Dv = values.shape[-1]
    H = n_heads
    assert Dk % H == 0 and Dv % H == 0
    hd_k, hd_v = Dk // H, Dv // H
    Lp = L + 1                    # attn_bias=True appends one bias "token"
    J = H * Lp                    # (head, position) chunks of the raw head view
    P = Dk + Dv                   # packed [key | value] width per block
    N = len(block_params)
    f32 = jnp.float32

    # Blocks fused per grid step: enough for a lane-dense (>=128-lane) output
    # tile; when N is large the grid keeps >= 2 steps for v7x's two TCs.
    G = min(N, max(1, -(-128 // P)))
    n_pad = -(-N // G) * G
    S = n_pad // G
    params = list(block_params) + [block_params[-1]] * (n_pad - N)

    # ---- shared operands (block independent, stay resident in VMEM) --------
    aug_pad = (-(L * Dk + 1)) % 8          # pad the ones-column width to 8
    keys_aug = jnp.concatenate(
        [keys.reshape(B, L * Dk).astype(f32),
         jnp.ones((B, 1), f32),
         jnp.zeros((B, aug_pad), f32)], axis=1)
    vals2d = values.reshape(B, L * Dv).astype(f32)
    vals_tiled = jnp.tile(vals2d, (1, G))

    K = G * J
    LDv = L * Dv
    kk = jnp.arange(K)
    grp = (kk[:, None] // Lp == kk[None, :] // Lp).astype(f32)            # (K, K)

    i = jnp.arange(G * LDv)
    blk_i = i // LDv
    chunk_i = (i % LDv) // hd_v
    expd_all = ((kk[:, None] // J == blk_i[None, :]) &
                (kk[:, None] % J == chunk_i[None, :])).astype(f32)        # (K, G*LDv)

    o2 = jnp.arange(G * Dv)
    out_ch_i = (chunk_i // Lp) * hd_v + i % hd_v
    fold_all = ((blk_i[:, None] == (o2 // Dv)[None, :]) &
                (out_ch_i[:, None] == (o2 % Dv)[None, :])).astype(f32)    # (G*LDv, G*Dv)

    lnm = (o2[:, None] // Dv == o2[None, :] // Dv).astype(f32) / Dv       # (G*Dv, G*Dv)

    # ---- per-block parameters, host-precomputed & packed per grid step -----
    def build(bp):
        q = bp["query"].reshape(H, hd_k).astype(f32)
        r = jnp.arange(L * Dk)
        j_r = r // hd_k                                 # data chunk of key lane r
        qmat_in = jnp.where(j_r[:, None] == jnp.arange(J)[None, :],
                            q[j_r // Lp, r % hd_k][:, None], 0.0)         # (L*Dk, J)
        kb = bp["k_bias"].astype(f32).reshape(H, hd_k)
        head_b = (L * H + jnp.arange(H)) // Lp          # head of each bias chunk
        blog = jnp.concatenate(
            [jnp.zeros((L * H,), f32), jnp.sum(q[head_b] * kb, axis=-1)])
        qk_aug = jnp.concatenate(
            [qmat_in, blog[None, :], jnp.zeros((aug_pad, J), f32)], axis=0)

        vb = bp["v_bias"].astype(f32).reshape(H, hd_v)
        o = jnp.arange(Dv)
        mvb_b = jnp.where(head_b[:, None] == (o // hd_v)[None, :],
                          vb[jnp.arange(H)[:, None], (o % hd_v)[None, :]], 0.0)
        mvb = jnp.concatenate([jnp.zeros((L * H, Dv), f32), mvb_b], axis=0)  # (J, Dv)

        wproj = jnp.concatenate([bp["w_key"], bp["w_val"]], axis=-1).astype(f32)
        bproj = jnp.concatenate([bp["b_key"], bp["b_val"]], axis=-1).astype(f32)
        wf = bp["ln_w"].astype(f32)[:, None] * wproj    # LayerNorm affine folded
        bf = bp["ln_b"].astype(f32) @ wproj + bproj
        return qk_aug, mvb, wf, bf

    built = [build(bp) for bp in params]
    qk_l, mvb_l, wf_l, bf_l = [], [], [], []
    for s in range(S):
        qs, ms, ws, bs = zip(*built[s * G:(s + 1) * G])
        qk_l.append(jnp.concatenate(qs, axis=1))        # (W, K)
        mvb_l.append(_block_diag(ms))                   # (K, G*Dv)
        wf_l.append(_block_diag(ws))                    # (G*Dv, G*P)
        bf_l.append(jnp.concatenate(bs)[None, :])       # (1, G*P)
    qk_s = jnp.stack(qk_l)
    mvb_s = jnp.stack(mvb_l)
    wf_s = jnp.stack(wf_l)
    bf_s = jnp.stack(bf_l)

    def shared(a):
        nd = a.ndim
        return pl.BlockSpec(a.shape, lambda s, nd=nd: (0,) * nd)

    def per_step(a):
        tail = a.shape[1:]
        nz = len(tail)
        return pl.BlockSpec((1,) + tail, lambda s, nz=nz: (s,) + (0,) * nz)

    out = pl.pallas_call(
        _qimia_step_kernel,
        grid=(S,),
        in_specs=[shared(keys_aug), shared(vals_tiled), shared(expd_all),
                  shared(fold_all), shared(grp), shared(lnm),
                  per_step(qk_s), per_step(mvb_s), per_step(wf_s), per_step(bf_s)],
        out_specs=pl.BlockSpec((1, B, G * P), lambda s: (s, 0, 0)),
        out_shape=jax.ShapeDtypeStruct((S, B, G * P), f32),
        compiler_params=pltpu.CompilerParams(
            dimension_semantics=("parallel",),          # steps are independent
            vmem_limit_bytes=32 * 1024 * 1024),
    )(keys_aug, vals_tiled, expd_all, fold_all, grp, lnm,
      qk_s, mvb_s, wf_s, bf_s)

    # Un-pack the lane-dense (B, G*P) tiles -> (block, B, [key | value]).
    out = out.reshape(S, B, G, P).transpose(0, 2, 1, 3).reshape(n_pad, B, P)[:N]
    # torch.cat(..., dim=0): only shape-consistent when the incoming L == 1.
    key_blocks = out[:, :, :Dk].reshape(N * B, 1, Dk)
    val_blocks = out[:, :, Dk:].reshape(N * B, 1, Dv)
    keys_out = jnp.concatenate([keys.astype(f32), key_blocks], axis=0)
    values_out = jnp.concatenate([values.astype(f32), val_blocks], axis=0)
    return keys_out, values_out


def _reference_forward(keys, values, block_params, n_heads):
    """Pure-JAX re-implementation of the PyTorch module (verification only)."""
    B, L, Dk = keys.shape
    Dv = values.shape[-1]
    H = n_heads
    key_list, val_list = [], []
    for bp in block_params:
        ke = jnp.concatenate([keys, jnp.broadcast_to(bp["k_bias"], (B, 1, Dk))], axis=1)
        ve = jnp.concatenate([values, jnp.broadcast_to(bp["v_bias"], (B, 1, Dv))], axis=1)
        Q = jnp.tile(bp["query"].reshape(H, 1, Dk // H), (B, 1, 1))
        Kh = ke.reshape(B * H, L + 1, Dk // H)          # raw row-major head view
        Vh = ve.reshape(B * H, L + 1, Dv // H)
        Aw = jax.nn.softmax(jnp.einsum('mqc,mpc->mqp', Q, Kh), axis=2)
        A = jnp.einsum('mqp,mpc->mqc', Aw, Vh).reshape(B, Dv)
        mean = A.mean(-1, keepdims=True)
        var = jnp.mean((A - mean) ** 2, axis=-1, keepdims=True)
        A = (A - mean) / jnp.sqrt(var + LN_EPS) * bp["ln_w"] + bp["ln_b"]
        key_list.append((A @ bp["w_key"] + bp["b_key"])[:, None, :])
        val_list.append((A @ bp["w_val"] + bp["b_val"])[:, None, :])
    keys_out = jnp.concatenate([keys] + key_list, axis=0)
    values_out = jnp.concatenate([values] + val_list, axis=0)
    return keys_out, values_out


def init_block_params(rng, key_dim, embed_dim, n_heads):
    ks = jax.random.split(rng, 3)
    hd_k = key_dim // n_heads
    return dict(
        # layer_num=None in BaseBlock's LQA -> query initialized to zeros
        query=jnp.zeros((n_heads, 1, hd_k), jnp.float32),
        k_bias=jax.random.normal(ks[0], (key_dim,), jnp.float32) / key_dim ** 0.5,
        v_bias=jnp.zeros((embed_dim,), jnp.float32),
        ln_w=jnp.ones((embed_dim,), jnp.float32),
        ln_b=jnp.zeros((embed_dim,), jnp.float32),
        # concrete block(): linear key / value projections (deterministic init)
        w_key=jax.random.normal(ks[1], (embed_dim, key_dim), jnp.float32) * 0.02,
        b_key=jnp.zeros((key_dim,), jnp.float32),
        w_val=jax.random.normal(ks[2], (embed_dim, embed_dim), jnp.float32) * 0.02,
        b_val=jnp.zeros((embed_dim,), jnp.float32),
    )


if __name__ == "__main__":
    B, L = 2, 1          # L must be 1 (QIMIA_Parallel cats (B,L,D) with (B,1,D) on dim 0)
    KEY_DIM, EMBED_DIM, N_HEADS, N_BLOCKS = 32, 32, 4, 2

    root = jax.random.PRNGKey(0)
    kk_, kv_, *pkeys = jax.random.split(root, 2 + N_BLOCKS)
    keys = jax.random.normal(kk_, (B, L, KEY_DIM), jnp.float32)
    values = jax.random.normal(kv_, (B, L, EMBED_DIM), jnp.float32)
    block_params = [init_block_params(pk, KEY_DIM, EMBED_DIM, N_HEADS)
                    for pk in pkeys]

    keys_out, values_out = qimia_parallel_forward(keys, values, block_params, N_HEADS)
    jax.block_until_ready((keys_out, values_out))

    assert keys_out.shape == ((1 + N_BLOCKS) * B, L, KEY_DIM)
    assert values_out.shape == ((1 + N_BLOCKS) * B, L, EMBED_DIM)
    assert keys_out.dtype == jnp.float32 and values_out.dtype == jnp.float32
    assert bool(jnp.all(jnp.isfinite(keys_out))) and bool(jnp.all(jnp.isfinite(values_out)))

    k_ref, v_ref = _reference_forward(keys, values, block_params, N_HEADS)
    assert bool(jnp.allclose(keys_out, k_ref, rtol=1e-4, atol=1e-4))
    assert bool(jnp.allclose(values_out, v_ref, rtol=1e-4, atol=1e-4))
    print("KERNEL_OK")
</pallas_src>

<mosaic_0001>
module attributes {stable_mosaic.version = 11 : i64} {
  func.func @_qimia_step_kernel(%arg0: i32, %arg1: memref<2x40xf32, #tpu.memory_space<vmem>>, %arg2: memref<2x64xf32, #tpu.memory_space<vmem>>, %arg3: memref<16x64xf32, #tpu.memory_space<vmem>>, %arg4: memref<64x64xf32, #tpu.memory_space<vmem>>, %arg5: memref<16x16xf32, #tpu.memory_space<vmem>>, %arg6: memref<64x64xf32, #tpu.memory_space<vmem>>, %arg7: memref<1x40x16xf32, #tpu.memory_space<vmem>>, %arg8: memref<1x16x64xf32, #tpu.memory_space<vmem>>, %arg9: memref<1x64x128xf32, #tpu.memory_space<vmem>>, %arg10: memref<1x1x128xf32, #tpu.memory_space<vmem>>, %arg11: memref<1x2x128xf32, #tpu.memory_space<vmem>>) attributes {dimension_semantics = [#tpu.dimension_semantics<parallel>], iteration_bounds = array<i64: 1>, scalar_prefetch = 0 : i64, scratch_operands = 0 : i64, tpu.core_type = #tpu.core_type<tc>, window_params = [{pipeline_mode = #tpu.pipeline_mode<synchronous>, transform_indices = @transform_0, window_bounds = array<i64: 2, 40>}, {pipeline_mode = #tpu.pipeline_mode<synchronous>, transform_indices = @transform_1, window_bounds = array<i64: 2, 64>}, {pipeline_mode = #tpu.pipeline_mode<synchronous>, transform_indices = @transform_2, window_bounds = array<i64: 16, 64>}, {pipeline_mode = #tpu.pipeline_mode<synchronous>, transform_indices = @transform_3, window_bounds = array<i64: 64, 64>}, {pipeline_mode = #tpu.pipeline_mode<synchronous>, transform_indices = @transform_4, window_bounds = array<i64: 16, 16>}, {pipeline_mode = #tpu.pipeline_mode<synchronous>, transform_indices = @transform_5, window_bounds = array<i64: 64, 64>}, {transform_indices = @transform_6, window_bounds = array<i64: 1, 40, 16>}, {transform_indices = @transform_7, window_bounds = array<i64: 1, 16, 64>}, {transform_indices = @transform_8, window_bounds = array<i64: 1, 64, 128>}, {transform_indices = @transform_9, window_bounds = array<i64: 1, 1, 128>}, {transform_indices = @transform_10, window_bounds = array<i64: 1, 2, 128>}]} {
    %c0 = arith.constant 0 : index
    %c0_0 = arith.constant 0 : index
    %0 = vector.load %arg1[%c0, %c0_0] : memref<2x40xf32, #tpu.memory_space<vmem>>, vector<2x40xf32>
    %c0_1 = arith.constant 0 : index
    %c0_2 = arith.constant 0 : index
    %c0_3 = arith.constant 0 : index
    %1 = vector.load %arg7[%c0_1, %c0_2, %c0_3] : memref<1x40x16xf32, #tpu.memory_space<vmem>>, vector<1x40x16xf32>
    %2 = vector.shape_cast %1 : vector<1x40x16xf32> to vector<40x16xf32>
    %cst = arith.constant dense<0.000000e+00> : vector<2x16xf32>
    %3 = tpu.matmul %0, %2, %cst {dimension_numbers = #tpu.dot_dimension_numbers<[1], [0], [0], [1], [0, 0, 1, 1], [], []>} : vector<2x40xf32>, vector<40x16xf32>, vector<2x16xf32> -> vector<2x16xf32>
    %c0_4 = arith.constant 0 : index
    %c0_5 = arith.constant 0 : index
    %4 = vector.load %arg5[%c0_4, %c0_5] : memref<16x16xf32, #tpu.memory_space<vmem>>, vector<16x16xf32>
    %cst_6 = arith.constant 1.000000e+00 : f32
    %5 = vector.broadcast %cst_6 : f32 to vector<16x16xf32>
    %6 = arith.subf %4, %5 : vector<16x16xf32>
    %cst_7 = arith.constant 1.000000e+30 : f32
    %7 = vector.broadcast %cst_7 : f32 to vector<16x16xf32>
    %8 = arith.mulf %6, %7 : vector<16x16xf32>
    %9 = vector.shape_cast %3 : vector<2x16xf32> to vector<2x1x16xf32>
    %10 = vector.shape_cast %8 : vector<16x16xf32> to vector<1x16x16xf32>
    %11 = vector.broadcast %9 : vector<2x1x16xf32> to vector<2x16x16xf32>
    %12 = vector.broadcast %10 : vector<1x16x16xf32> to vector<2x16x16xf32>
    %13 = arith.addf %11, %12 : vector<2x16x16xf32>
    %cst_8 = arith.constant dense<0xFF800000> : vector<2x16xf32>
    %14 = vector.multi_reduction <maximumf>, %13, %cst_8 [2] : vector<2x16x16xf32> to vector<2x16xf32>
    %15 = arith.subf %3, %14 : vector<2x16xf32>
    %16 = math.exp %15 : vector<2x16xf32>
    %cst_9 = arith.constant dense<0.000000e+00> : vector<2x16xf32>
    %17 = tpu.matmul %16, %4, %cst_9 {dimension_numbers = #tpu.dot_dimension_numbers<[1], [0], [0], [1], [0, 0, 1, 1], [], []>} : vector<2x16xf32>, vector<16x16xf32>, vector<2x16xf32> -> vector<2x16xf32>
    %18 = arith.divf %16, %17 : vector<2x16xf32>
    %c0_10 = arith.constant 0 : index
    %c0_11 = arith.constant 0 : index
    %19 = vector.load %arg3[%c0_10, %c0_11] : memref<16x64xf32, #tpu.memory_space<vmem>>, vector<16x64xf32>
    %cst_12 = arith.constant dense<0.000000e+00> : vector<2x64xf32>
    %20 = tpu.matmul %18, %19, %cst_12 {dimension_numbers = #tpu.dot_dimension_numbers<[1], [0], [0], [1], [0, 0, 1, 1], [], []>} : vector<2x16xf32>, vector<16x64xf32>, vector<2x64xf32> -> vector<2x64xf32>
    %c0_13 = arith.constant 0 : index
    %c0_14 = arith.constant 0 : index
    %21 = vector.load %arg2[%c0_13, %c0_14] : memref<2x64xf32, #tpu.memory_space<vmem>>, vector<2x64xf32>
    %22 = arith.mulf %20, %21 : vector<2x64xf32>
    %c0_15 = arith.constant 0 : index
    %c0_16 = arith.constant 0 : index
    %23 = vector.load %arg4[%c0_15, %c0_16] : memref<64x64xf32, #tpu.memory_space<vmem>>, vector<64x64xf32>
    %cst_17 = arith.constant dense<0.000000e+00> : vector<2x64xf32>
    %24 = tpu.matmul %22, %23, %cst_17 {dimension_numbers = #tpu.dot_dimension_numbers<[1], [0], [0], [1], [0, 0, 1, 1], [], []>} : vector<2x64xf32>, vector<64x64xf32>, vector<2x64xf32> -> vector<2x64xf32>
    %c0_18 = arith.constant 0 : index
    %c0_19 = arith.constant 0 : index
    %c0_20 = arith.constant 0 : index
    %25 = vector.load %arg8[%c0_18, %c0_19, %c0_20] : memref<1x16x64xf32, #tpu.memory_space<vmem>>, vector<1x16x64xf32>
    %26 = vector.shape_cast %25 : vector<1x16x64xf32> to vector<16x64xf32>
    %cst_21 = arith.constant dense<0.000000e+00> : vector<2x64xf32>
    %27 = tpu.matmul %18, %26, %cst_21 {dimension_numbers = #tpu.dot_dimension_numbers<[1], [0], [0], [1], [0, 0, 1, 1], [], []>} : vector<2x16xf32>, vector<16x64xf32>, vector<2x64xf32> -> vector<2x64xf32>
    %28 = arith.addf %24, %27 : vector<2x64xf32>
    %c0_22 = arith.constant 0 : index
    %c0_23 = arith.constant 0 : index
    %29 = vector.load %arg6[%c0_22, %c0_23] : memref<64x64xf32, #tpu.memory_space<vmem>>, vector<64x64xf32>
    %cst_24 = arith.constant dense<0.000000e+00> : vector<2x64xf32>
    %30 = tpu.matmul %28, %29, %cst_24 {dimension_numbers = #tpu.dot_dimension_numbers<[1], [0], [0], [1], [0, 0, 1, 1], [], []>} : vector<2x64xf32>, vector<64x64xf32>, vector<2x64xf32> -> vector<2x64xf32>
    %31 = arith.subf %28, %30 : vector<2x64xf32>
    %32 = arith.mulf %31, %31 : vector<2x64xf32>
    %c0_25 = arith.constant 0 : index
    %c0_26 = arith.constant 0 : index
    %33 = vector.load %arg6[%c0_25, %c0_26] : memref<64x64xf32, #tpu.memory_space<vmem>>, vector<64x64xf32>
    %cst_27 = arith.constant dense<0.000000e+00> : vector<2x64xf32>
    %34 = tpu.matmul %32, %33, %cst_27 {dimension_numbers = #tpu.dot_dimension_numbers<[1], [0], [0], [1], [0, 0, 1, 1], [], []>} : vector<2x64xf32>, vector<64x64xf32>, vector<2x64xf32> -> vector<2x64xf32>
    %cst_28 = arith.constant 9.99999974E-6 : f32
    %35 = vector.broadcast %cst_28 : f32 to vector<2x64xf32>
    %36 = arith.addf %34, %35 : vector<2x64xf32>
    %37 = math.rsqrt %36 : vector<2x64xf32>
    %38 = arith.mulf %31, %37 : vector<2x64xf32>
    %c0_29 = arith.constant 0 : index
    %c0_30 = arith.constant 0 : index
    %c0_31 = arith.constant 0 : index
    %39 = vector.load %arg9[%c0_29, %c0_30, %c0_31] : memref<1x64x128xf32, #tpu.memory_space<vmem>>, vector<1x64x128xf32>
    %40 = vector.shape_cast %39 : vector<1x64x128xf32> to vector<64x128xf32>
    %cst_32 = arith.constant dense<0.000000e+00> : vector<2x128xf32>
    %41 = tpu.matmul %38, %40, %cst_32 {dimension_numbers = #tpu.dot_dimension_numbers<[1], [0], [0], [1], [0, 0, 1, 1], [], []>} : vector<2x64xf32>, vector<64x128xf32>, vector<2x128xf32> -> vector<2x128xf32>
    %c0_33 = arith.constant 0 : index
    %c0_34 = arith.constant 0 : index
    %c0_35 = arith.constant 0 : index
    %42 = vector.load %arg10[%c0_33, %c0_34, %c0_35] : memref<1x1x128xf32, #tpu.memory_space<vmem>>, vector<1x1x128xf32>
    %43 = vector.shape_cast %42 : vector<1x1x128xf32> to vector<1x128xf32>
    %44 = vector.broadcast %43 : vector<1x128xf32> to vector<2x128xf32>
    %45 = arith.addf %41, %44 : vector<2x128xf32>
    %c0_36 = arith.constant 0 : index
    %c0_37 = arith.constant 0 : index
    %c0_38 = arith.constant 0 : index
    %46 = vector.load %arg11[%c0_36, %c0_37, %c0_38] : memref<1x2x128xf32, #tpu.memory_space<vmem>>, vector<1x2x128xf32>
    %47 = vector.shape_cast %46 : vector<1x2x128xf32> to vector<2x128xf32>
    %48 = vector.shape_cast %45 : vector<2x128xf32> to vector<1x2x128xf32>
    tpu.vector_store %arg11[%c0_36, %c0_37, %c0_38], %48 {strides = array<i32>} : memref<1x2x128xf32, #tpu.memory_space<vmem>>, vector<1x2x128xf32>,
    return
  }
  func.func @transform_0(%arg0: i32) -> (i32, i32) {
    %c0_i32 = arith.constant 0 : i32
    %c0_i32_0 = arith.constant 0 : i32
    %c0_i32_1 = arith.constant 0 : i32
    return %c0_i32, %c0_i32_0 : i32, i32
  }
  func.func @transform_1(%arg0: i32) -> (i32, i32) {
    %c0_i32 = arith.constant 0 : i32
    %c0_i32_0 = arith.constant 0 : i32
    %c0_i32_1 = arith.constant 0 : i32
    return %c0_i32, %c0_i32_0 : i32, i32
  }
  func.func @transform_2(%arg0: i32) -> (i32, i32) {
    %c0_i32 = arith.constant 0 : i32
    %c0_i32_0 = arith.constant 0 : i32
    %c0_i32_1 = arith.constant 0 : i32
    return %c0_i32, %c0_i32_0 : i32, i32
  }
  func.func @transform_3(%arg0: i32) -> (i32, i32) {
    %c0_i32 = arith.constant 0 : i32
    %c0_i32_0 = arith.constant 0 : i32
    %c0_i32_1 = arith.constant 0 : i32
    return %c0_i32, %c0_i32_0 : i32, i32
  }
  func.func @transform_4(%arg0: i32) -> (i32, i32) {
    %c0_i32 = arith.constant 0 : i32
    %c0_i32_0 = arith.constant 0 : i32
    %c0_i32_1 = arith.constant 0 : i32
    return %c0_i32, %c0_i32_0 : i32, i32
  }
  func.func @transform_5(%arg0: i32) -> (i32, i32) {
    %c0_i32 = arith.constant 0 : i32
    %c0_i32_0 = arith.constant 0 : i32
    %c0_i32_1 = arith.constant 0 : i32
    return %c0_i32, %c0_i32_0 : i32, i32
  }
  func.func @transform_6(%arg0: i32) -> (i32, i32, i32) {
    %c0_i32 = arith.constant 0 : i32
    %c0_i32_0 = arith.constant 0 : i32
    %c0_i32_1 = arith.constant 0 : i32
    return %arg0, %c0_i32, %c0_i32_0 : i32, i32, i32
  }
  func.func @transform_7(%arg0: i32) -> (i32, i32, i32) {
    %c0_i32 = arith.constant 0 : i32
    %c0_i32_0 = arith.constant 0 : i32
    %c0_i32_1 = arith.constant 0 : i32
    return %arg0, %c0_i32, %c0_i32_0 : i32, i32, i32
  }
  func.func @transform_8(%arg0: i32) -> (i32, i32, i32) {
    %c0_i32 = arith.constant 0 : i32
    %c0_i32_0 = arith.constant 0 : i32
    %c0_i32_1 = arith.constant 0 : i32
    return %arg0, %c0_i32, %c0_i32_0 : i32, i32, i32
  }
  func.func @transform_9(%arg0: i32) -> (i32, i32, i32) {
    %c0_i32 = arith.constant 0 : i32
    %c0_i32_0 = arith.constant 0 : i32
    %c0_i32_1 = arith.constant 0 : i32
    return %arg0, %c0_i32, %c0_i32_0 : i32, i32, i32
  }
  func.func @transform_10(%arg0: i32) -> (i32, i32, i32) {
    %c0_i32 = arith.constant 0 : i32
    %c0_i32_0 = arith.constant 0 : i32
    %c0_i32_1 = arith.constant 0 : i32
    return %arg0, %c0_i32, %c0_i32_0 : i32, i32, i32
  }
}

</mosaic_0001>

<llo_original>
// kernel: tpu_custom_call.1
$region0: #{tpu_custom_call.1}
  #allocation0 [shape = 'u32[]', space=smem, size = 0x4, offset = 0x4, fixed_abs, tag = 'smem constant byte address 0x4 - core index']
  #allocation1 [shape = 'u32[144,128]{1,0:T(1,128)}', space=vmem, size = 0x12000, scoped, tag = 'internal scratch']
  %s0 = inlined_call_operand.hbm [shape: f32[2,40], index: 0, kind: input, shape index: {}]
  %s1 = inlined_call_operand.hbm [shape: f32[2,64], index: 1, kind: input, shape index: {}]
  %s2 = inlined_call_operand.hbm [shape: f32[16,64], index: 2, kind: input, shape index: {}]
  %s3 = inlined_call_operand.hbm [shape: f32[64,64], index: 3, kind: input, shape index: {}]
  %s4 = inlined_call_operand.hbm [shape: f32[16,16], index: 4, kind: input, shape index: {}]
  %s5 = inlined_call_operand.vmem [shape: f32[64,64], index: 5, kind: input, shape index: {}]
  %s6 = inlined_call_operand.vmem [shape: f32[1,40,16], index: 6, kind: input, shape index: {}]
  %s7 = inlined_call_operand.hbm [shape: f32[1,16,64], index: 7, kind: input, shape index: {}]
  %s8 = inlined_call_operand.hbm [shape: f32[1,64,128], index: 8, kind: input, shape index: {}]
  %s9 = inlined_call_operand.vmem [shape: f32[1,1,128], index: 9, kind: input, shape index: {}]
  %s10 = inlined_call_operand.hbm [shape: f32[1,2,128], index: 10, kind: output, shape index: {}]
  %s11 = sld [smem:[#allocation0]]
  $region78: #{tpu_custom_call.1} parent=0
    _
  %s13 = ssub.s32 1, %s11
  %s14 = scalar_select 0, %s13, %s11
  $region1: #{tpu_custom_call.1} parent=0
    #allocation2 [shape = 'u8[1024]{0}', space=vmem, size = 0x400, scoped, tag = 'input window, operand 0, single buffered']
    #allocation3 [shape = 's32[1]{0}', space=sflag, size = 0x4, scoped, tag = 'scoped memory for tpu_custom_call.1']
    #allocation4 [shape = 's32[1]{0}', space=sflag, size = 0x4, scoped, tag = 'scoped memory for tpu_custom_call.1']
    #allocation5 [shape = 'u8[1024]{0}', space=vmem, size = 0x400, scoped, tag = 'input window, operand 1, single buffered']
    #allocation6 [shape = 's32[1]{0}', space=sflag, size = 0x4, scoped, tag = 'scoped memory for tpu_custom_call.1']
    #allocation7 [shape = 'u8[8192]{0}', space=vmem, size = 0x2000, scoped, tag = 'input window, operand 2, single buffered']
    #allocation8 [shape = 'u8[32768]{0}', space=vmem, size = 0x8000, scoped, tag = 'input window, operand 3, single buffered']
    #allocation9 [shape = 's32[1]{0}', space=sflag, size = 0x4, scoped, tag = 'scoped memory for tpu_custom_call.1']
    #allocation10 [shape = 'u8[8192]{0}', space=vmem, size = 0x2000, scoped, tag = 'input window, operand 4, single buffered']
    #allocation11 [shape = 'u8[8192]{0}', space=vmem, size = 0x2000, scoped, tag = 'input window, operand 7, single buffered']
    #allocation12 [shape = 's32[1]{0}', space=sflag, size = 0x4, scoped, tag = 'scoped memory for tpu_custom_call.1']
    #allocation13 [shape = 'u8[32768]{0}', space=vmem, size = 0x8000, scoped, tag = 'input window, operand 8, single buffered']
    #allocation14 [shape = 'u8[1024]{0}', space=vmem, size = 0x400, scoped, tag = 'output window, operand 0, single buffered']
    %15 = vsyncpa [#allocation3], 0
    %16 = vsyncpa [#allocation6], 0
    %17 = vsyncpa [#allocation9], 0
    %18 = vsyncpa [#allocation12], 0
    %19 = vsyncpa [#allocation4], 0
    // Predicated region
    $region2: #{tpu_custom_call.1} parent=1 // pred_check
      _
    $region3: #{tpu_custom_call.1} parent=1 // pred_check_branch
      %21 = sbr.rel (0) target = $region5
    $region4: #{tpu_custom_call.1} parent=1 // pred_region
      %s23 = ssub.s32 32, 32
      %24 = vsyncadd [#allocation3], %s23
      %s26 = sshll.u32 [#allocation2], 4
      %s27 = int_to_ptr.vmem [resolvable:$true] %s26
      %29 = dma.hbm_to_vmem [thread:$0]  %s0, 32, %s27, [#allocation3]
    $region5: #{tpu_custom_call.1} parent=1 // pred_fallthru
      _
    // Predicated region
    $region6: #{tpu_custom_call.1} parent=1 // pred_check
      _
    $region7: #{tpu_custom_call.1} parent=1 // pred_check_branch
      %31 = sbr.rel (0) target = $region9
    $region8: #{tpu_custom_call.1} parent=1 // pred_region
      %s33 = ssub.s32 32, 32
      %34 = vsyncadd [#allocation6], %s33
      %s36 = sshll.u32 [#allocation5], 4
      %s37 = int_to_ptr.vmem [resolvable:$true] %s36
      %39 = dma.hbm_to_vmem [thread:$0]  %s1, 32, %s37, [#allocation6]
    $region9: #{tpu_custom_call.1} parent=1 // pred_fallthru
      _
    // Predicated region
    $region10: #{tpu_custom_call.1} parent=1 // pred_check
      _
    $region11: #{tpu_custom_call.1} parent=1 // pred_check_branch
      %41 = sbr.rel (0) target = $region13
    $region12: #{tpu_custom_call.1} parent=1 // pred_region
      %s43 = ssub.s32 256, 256
      %44 = vsyncadd [#allocation6], %s43
      %s45 = sshll.u32 [#allocation7], 4
      %s46 = int_to_ptr.vmem [resolvable:$true] %s45
      %51 = dma.hbm_to_vmem [thread:$0]  %s2, 256, %s46, [#allocation6], 128, 128, 8
    $region13: #{tpu_custom_call.1} parent=1 // pred_fallthru
      _
    // Predicated region
    $region14: #{tpu_custom_call.1} parent=1 // pred_check
      _
    $region15: #{tpu_custom_call.1} parent=1 // pred_check_branch
      %53 = sbr.rel (0) target = $region17
    $region16: #{tpu_custom_call.1} parent=1 // pred_region
      %s55 = ssub.s32 1024, 1024
      %56 = vsyncadd [#allocation9], %s55
      %s57 = sshll.u32 [#allocation8], 4
      %s58 = int_to_ptr.vmem [resolvable:$true] %s57
      %63 = dma.hbm_to_vmem [thread:$0]  %s3, 1024, %s58, [#allocation9], 128, 128, 8
    $region17: #{tpu_custom_call.1} parent=1 // pred_fallthru
      _
    // Predicated region
    $region18: #{tpu_custom_call.1} parent=1 // pred_check
      _
    $region19: #{tpu_custom_call.1} parent=1 // pred_check_branch
      %65 = sbr.rel (0) target = $region21
    $region20: #{tpu_custom_call.1} parent=1 // pred_region
      %s67 = ssub.s32 256, 256
      %68 = vsyncadd [#allocation9], %s67
      %s69 = sshll.u32 [#allocation10], 4
      %s70 = int_to_ptr.vmem [resolvable:$true] %s69
      %75 = dma.hbm_to_vmem [thread:$0]  %s4, 256, %s70, [#allocation9], 128, 128, 8
    $region21: #{tpu_custom_call.1} parent=1 // pred_fallthru
      _
    // Predicated region
    $region22: #{tpu_custom_call.1} parent=1 // pred_check
      _
    $region23: #{tpu_custom_call.1} parent=1 // pred_check_branch
      %77 = sbr.rel (0) target = $region25
    $region24: #{tpu_custom_call.1} parent=1 // pred_region
      _
    $region25: #{tpu_custom_call.1} parent=1 // pred_fallthru
      _
    // Predicated region
    $region26: #{tpu_custom_call.1} parent=1 // pred_check
      _
    $region27: #{tpu_custom_call.1} parent=1 // pred_check_branch
      %79 = sbr.rel (0) target = $region29
    $region28: #{tpu_custom_call.1} parent=1 // pred_region
      _
    $region29: #{tpu_custom_call.1} parent=1 // pred_fallthru
      _
    // Predicated region
    $region30: #{tpu_custom_call.1} parent=1 // pred_check
      _
    $region31: #{tpu_custom_call.1} parent=1 // pred_check_branch
      %81 = sbr.rel (0) target = $region33
    $region32: #{tpu_custom_call.1} parent=1 // pred_region
      %s83 = ssub.s32 256, 256
      %84 = vsyncadd [#allocation12], %s83
      %s85 = sshll.u32 [#allocation11], 4
      %s86 = int_to_ptr.vmem [resolvable:$true] %s85
      %91 = dma.hbm_to_vmem [thread:$0]  %s7, 256, %s86, [#allocation12], 128, 128, 8
    $region33: #{tpu_custom_call.1} parent=1 // pred_fallthru
      _
    // Predicated region
    $region34: #{tpu_custom_call.1} parent=1 // pred_check
      _
    $region35: #{tpu_custom_call.1} parent=1 // pred_check_branch
      %93 = sbr.rel (0) target = $region37
    $region36: #{tpu_custom_call.1} parent=1 // pred_region
      %s95 = ssub.s32 1024, 1024
      %96 = vsyncadd [#allocation12], %s95
      %s97 = sshll.u32 [#allocation13], 4
      %s98 = int_to_ptr.vmem [resolvable:$true] %s97
      %103 = dma.hbm_to_vmem [thread:$0]  %s8, 1024, %s98, [#allocation12], 128, 128, 8
    $region37: #{tpu_custom_call.1} parent=1 // pred_fallthru
      _
    // Predicated region
    $region38: #{tpu_custom_call.1} parent=1 // pred_check
      _
    $region39: #{tpu_custom_call.1} parent=1 // pred_check_branch
      %105 = sbr.rel (0) target = $region41
    $region40: #{tpu_custom_call.1} parent=1 // pred_region
      _
    $region41: #{tpu_custom_call.1} parent=1 // pred_fallthru
      _
    // Predicated region
    $region42: #{tpu_custom_call.1} parent=1 // pred_check
      _
    $region43: #{tpu_custom_call.1} parent=1 // pred_check_branch
      %107 = sbr.rel (0) target = $region45
    $region44: #{tpu_custom_call.1} parent=1 // pred_region
      %108 = dma.done [#allocation3], 32
    $region45: #{tpu_custom_call.1} parent=1 // pred_fallthru
      _
    // Predicated region
    $region46: #{tpu_custom_call.1} parent=1 // pred_check
      _
    $region47: #{tpu_custom_call.1} parent=1 // pred_check_branch
      %110 = sbr.rel (0) target = $region49
    $region48: #{tpu_custom_call.1} parent=1 // pred_region
      %111 = dma.done [#allocation6], 32
    $region49: #{tpu_custom_call.1} parent=1 // pred_fallthru
      _
    // Predicated region
    $region50: #{tpu_custom_call.1} parent=1 // pred_check
      _
    $region51: #{tpu_custom_call.1} parent=1 // pred_check_branch
      %113 = sbr.rel (0) target = $region53
    $region52: #{tpu_custom_call.1} parent=1 // pred_region
      %114 = dma.done [#allocation6], 256
    $region53: #{tpu_custom_call.1} parent=1 // pred_fallthru
      _
    // Predicated region
    $region54: #{tpu_custom_call.1} parent=1 // pred_check
      _
    $region55: #{tpu_custom_call.1} parent=1 // pred_check_branch
      %116 = sbr.rel (0) target = $region57
    $region56: #{tpu_custom_call.1} parent=1 // pred_region
      %117 = dma.done [#allocation9], 1024
    $region57: #{tpu_custom_call.1} parent=1 // pred_fallthru
      _
    // Predicated region
    $region58: #{tpu_custom_call.1} parent=1 // pred_check
      _
    $region59: #{tpu_custom_call.1} parent=1 // pred_check_branch
      %119 = sbr.rel (0) target = $region61
    $region60: #{tpu_custom_call.1} parent=1 // pred_region
      %120 = dma.done [#allocation9], 256
    $region61: #{tpu_custom_call.1} parent=1 // pred_fallthru
      _
    // Predicated region
    $region62: #{tpu_custom_call.1} parent=1 // pred_check
      _
    $region63: #{tpu_custom_call.1} parent=1 // pred_check_branch
      %122 = sbr.rel (0) target = $region65
    $region64: #{tpu_custom_call.1} parent=1 // pred_region
      %123 = dma.done [#allocation12], 256
    $region65: #{tpu_custom_call.1} parent=1 // pred_fallthru
      _
    // Predicated region
    $region66: #{tpu_custom_call.1} parent=1 // pred_check
      _
    $region67: #{tpu_custom_call.1} parent=1 // pred_check_branch
      %125 = sbr.rel (0) target = $region69
    $region68: #{tpu_custom_call.1} parent=1 // pred_region
      %126 = dma.done [#allocation12], 1024
    $region69: #{tpu_custom_call.1} parent=1 // pred_fallthru
      _
    %v127 = vld [vmem:[#allocation2] sm:$0x3]
    %v128 = vld [vmem:[%s6] sm:$0xff]
    %v129 = vld [vmem:[%s6 + $0x8] sm:$0xff]
    %v130 = vld [vmem:[%s6 + $0x10] sm:$0xff]
    %v131 = vld [vmem:[%s6 + $0x18] sm:$0xff]
    %v132 = vld [vmem:[%s6 + $0x20] sm:$0xff]
    %vm133 = vcmask 326656
    %v135 = vsel %vm133, %v127, 0
    %137 = vmatprep.subr.mxu0 0.0
    %138 = vmatpush1.msra.mxu0 0.0
    %139 = vmatprep.subr.mxu0 0.0
    %140 = vmatpush1.msra.mxu0 0.0
    %141 = vmatprep.subr.mxu0 0.0
    %142 = vmatpush1.msra.mxu0 0.0
    %143 = vmatprep.subr.mxu0 0.0
    %144 = vmatpush1.msra.mxu0 0.0
    %145 = vmatprep.subr.mxu0 0.0
    %146 = vmatpush1.msra.mxu0 0.0
    %147 = vmatprep.subr.mxu0 0.0
    %148 = vmatpush1.msra.mxu0 0.0
    %149 = vmatprep.subr.mxu0 0.0
    %150 = vmatpush1.msra.mxu0 0.0
    %151 = vmatprep.subr.mxu0 0.0
    %152 = vmatpush1.msra.mxu0 0.0
    %153 = vmatprep.subr.mxu0 0.0
    %154 = vmatpush1.msra.mxu0 0.0
    %155 = vmatprep.subr.mxu0 0.0
    %156 = vmatpush1.msra.mxu0 0.0
    %157 = vmatprep.subr.mxu0 0.0
    %158 = vmatpush1.msra.mxu0 0.0
    %159 = vmatprep.subr.mxu0 0.0
    %160 = vmatpush1.msra.mxu0 %v132
    %161 = vmatprep.subr.mxu0 0.0
    %162 = vmatpush1.msra.mxu0 %v131
    %163 = vmatprep.subr.mxu0 0.0
    %164 = vmatpush1.msra.mxu0 %v130
    %165 = vmatprep.subr.mxu0 0.0
    %166 = vmatpush1.msra.mxu0 %v129
    %167 = vmatprep.subr.mxu0 0.0
    %168 = vmatpush1.msra.mxu0 %v128
    %169 = vmatprep.subr.mxu0 0.0
    %170 = vmatpush2.msra.mxu0 0.0
    %171 = vmatprep.subr.mxu0 0.0
    %172 = vmatpush2.msra.mxu0 0.0
    %173 = vmatprep.subr.mxu0 0.0
    %174 = vmatpush2.msra.mxu0 0.0
    %175 = vmatprep.subr.mxu0 0.0
    %176 = vmatpush2.msra.mxu0 0.0
    %177 = vmatprep.subr.mxu0 0.0
    %178 = vmatpush2.msra.mxu0 0.0
    %179 = vmatprep.subr.mxu0 0.0
    %180 = vmatpush2.msra.mxu0 0.0
    %181 = vmatprep.subr.mxu0 0.0
    %182 = vmatpush2.msra.mxu0 0.0
    %183 = vmatprep.subr.mxu0 0.0
    %184 = vmatpush2.msra.mxu0 0.0
    %185 = vmatprep.subr.mxu0 0.0
    %186 = vmatpush2.msra.mxu0 0.0
    %187 = vmatprep.subr.mxu0 0.0
    %188 = vmatpush2.msra.mxu0 0.0
    %189 = vmatprep.subr.mxu0 0.0
    %190 = vmatpush2.msra.mxu0 0.0
    %191 = vmatprep.subr.mxu0 0.0
    %192 = vmatpush2.msra.mxu0 0.0
    %193 = vmatprep.subr.mxu0 0.0
    %194 = vmatpush2.msra.mxu0 0.0
    %195 = vmatprep.subr.mxu0 0.0
    %196 = vmatpush2.msra.mxu0 0.0
    %197 = vmatprep.subr.mxu0 0.0
    %198 = vmatpush2.msra.mxu0 0.0
    %199 = vmatprep.subr.mxu0 0.0
    %200 = vmatpush2.msra.mxu0 0.0
    %201 = vmatprep.mubr.f32.mxu0 0.0
    %202 = vmatmul.mubr.f32.gmra.mxu0 %v135
    %v203 = vpop.f32.mrf.mxu0
    %v204 = vadd.f32 0.0, %v203
    %v205 = vpop.f32.mrf.mxu0
    %206 = vdwg.mxu0
    %v207 = vld [vmem:[#allocation10] sm:$0xff]
    %v208 = vld [vmem:[#allocation10 + $0x8] sm:$0xff]
    %v209 = vsub.f32 %v207, 1.0
    %v210 = vsub.f32 %v208, 1.0
    %v211 = vmul.f32 %v209, 1e+30
    %v212 = vmul.f32 %v210, 1e+30
    %v215 = vunpack.c.l.s4 1966171168
    %v216 = vunpack.c.0.s8 %v215
    %v217 = vlaneseq
    %v218 = vshrl.u32 %v217, 7
    %v219 = vsub.s32 %v216, %v218
    %v220 = vrot.slane %v204, %v219
    %v221 = vcombine.high %v220, %v220
    %v223 = vunpack.c.l.s4 1966171168
    %v224 = vunpack.c.0.s8 %v223
    %v225 = vlaneseq
    %v226 = vshrl.u32 %v225, 7
    %v227 = vsub.s32 %v224, %v226
    %v228 = vrot.slane %v220, %v227
    %v230 = vunpack.c.l.s4 1966171168
    %v231 = vunpack.c.0.s8 %v230
    %v232 = vlaneseq
    %v233 = vshrl.u32 %v232, 7
    %v234 = vsub.s32 %v231, %v233
    %v235 = vrot.slane %v221, %v234
    %v236 = vlaneseq
    %v237 = vshrl.u32 %v236, 7
    %v238 = vsub.s32 0, %v237
    %v239 = vrot.slane %v228, %v238
    %v240 = vlaneseq
    %v241 = vshrl.u32 %v240, 7
    %v242 = vsub.s32 0, %v241
    %v243 = vrot.slane %v235, %v242
    %v246 = vadd.f32 %v239, %v211
    %v247 = vadd.f32 %v239, %v212
    %v248 = vadd.f32 %v243, %v211
    %v249 = vadd.f32 %v243, %v212
    %vm250 = vcmask 130048
    %v251 = vsel %vm250, %v246, -inf
    %252 = vmax.xlane.f32.xlu0 %v251
    %v253 = vpop.xlane.xlu0 %252
    %v254 = vsel %vm250, %v247, -inf
    %255 = vmax.xlane.f32.xlu0 %v254
    %v256 = vpop.xlane.xlu0 %255
    %v257 = vsel %vm250, %v248, -inf
    %258 = vmax.xlane.f32.xlu0 %v257
    %v259 = vpop.xlane.xlu0 %258
    %v260 = vsel %vm250, %v249, -inf
    %261 = vmax.xlane.f32.xlu0 %v260
    %v262 = vpop.xlane.xlu0 %261
    %v267 = vlaneseq
    %v268 = vand.u32 %v267, 127
    %v269 = vlaneseq
    %v270 = vshrl.u32 %v269, 7
    %v271 = vsub.s32 %v268, %v270
    %v272 = vrot.slane %v253, %v271
    %v273 = vadd.s32 %v268, 4294967288
    %v274 = vlaneseq
    %v275 = vshrl.u32 %v274, 7
    %v276 = vsub.s32 %v273, %v275
    %v277 = vrot.slane %v256, %v276
    %vm278 = vcmask 130112
    %v279 = vsel %vm278, %v277, %v272
    %v280 = vlaneseq
    %v281 = vshrl.u32 %v280, 7
    %v282 = vsub.s32 %v268, %v281
    %v283 = vrot.slane %v259, %v282
    %v284 = vlaneseq
    %v285 = vshrl.u32 %v284, 7
    %v286 = vsub.s32 %v273, %v285
    %v287 = vrot.slane %v262, %v286
    %v288 = vsel %vm278, %v287, %v283
    %vm289 = vcmask 1041409
    %v290 = vsel %vm289, %v288, %v279
    %v292 = vsub.f32 %v204, %v290
    %v293 = vmul.f32 %v292, 1.442695
    %v294 = vpow.pop %v293
    %v296 = vsel %vm250, %v294, 0
    %298 = vmatprep.subr.mxu0 0.0
    %299 = vmatpush1.msra.mxu0 0.0
    %300 = vmatprep.subr.mxu0 0.0
    %301 = vmatpush1.msra.mxu0 0.0
    %302 = vmatprep.subr.mxu0 0.0
    %303 = vmatpush1.msra.mxu0 0.0
    %304 = vmatprep.subr.mxu0 0.0
    %305 = vmatpush1.msra.mxu0 0.0
    %306 = vmatprep.subr.mxu0 0.0
    %307 = vmatpush1.msra.mxu0 0.0
    %308 = vmatprep.subr.mxu0 0.0
    %309 = vmatpush1.msra.mxu0 0.0
    %310 = vmatprep.subr.mxu0 0.0
    %311 = vmatpush1.msra.mxu0 0.0
    %312 = vmatprep.subr.mxu0 0.0
    %313 = vmatpush1.msra.mxu0 0.0
    %314 = vmatprep.subr.mxu0 0.0
    %315 = vmatpush1.msra.mxu0 0.0
    %316 = vmatprep.subr.mxu0 0.0
    %317 = vmatpush1.msra.mxu0 0.0
    %318 = vmatprep.subr.mxu0 0.0
    %319 = vmatpush1.msra.mxu0 0.0
    %320 = vmatprep.subr.mxu0 0.0
    %321 = vmatpush1.msra.mxu0 0.0
    %322 = vmatprep.subr.mxu0 0.0
    %323 = vmatpush1.msra.mxu0 0.0
    %324 = vmatprep.subr.mxu0 0.0
    %325 = vmatpush1.msra.mxu0 0.0
    %326 = vmatprep.subr.mxu0 0.0
    %327 = vmatpush1.msra.mxu0 %v208
    %328 = vmatprep.subr.mxu0 0.0
    %329 = vmatpush1.msra.mxu0 %v207
    %330 = vmatprep.subr.mxu0 0.0
    %331 = vmatpush2.msra.mxu0 0.0
    %332 = vmatprep.subr.mxu0 0.0
    %333 = vmatpush2.msra.mxu0 0.0
    %334 = vmatprep.subr.mxu0 0.0
    %335 = vmatpush2.msra.mxu0 0.0
    %336 = vmatprep.subr.mxu0 0.0
    %337 = vmatpush2.msra.mxu0 0.0
    %338 = vmatprep.subr.mxu0 0.0
    %339 = vmatpush2.msra.mxu0 0.0
    %340 = vmatprep.subr.mxu0 0.0
    %341 = vmatpush2.msra.mxu0 0.0
    %342 = vmatprep.subr.mxu0 0.0
    %343 = vmatpush2.msra.mxu0 0.0
    %344 = vmatprep.subr.mxu0 0.0
    %345 = vmatpush2.msra.mxu0 0.0
    %346 = vmatprep.subr.mxu0 0.0
    %347 = vmatpush2.msra.mxu0 0.0
    %348 = vmatprep.subr.mxu0 0.0
    %349 = vmatpush2.msra.mxu0 0.0
    %350 = vmatprep.subr.mxu0 0.0
    %351 = vmatpush2.msra.mxu0 0.0
    %352 = vmatprep.subr.mxu0 0.0
    %353 = vmatpush2.msra.mxu0 0.0
    %354 = vmatprep.subr.mxu0 0.0
    %355 = vmatpush2.msra.mxu0 0.0
    %356 = vmatprep.subr.mxu0 0.0
    %357 = vmatpush2.msra.mxu0 0.0
    %358 = vmatprep.subr.mxu0 0.0
    %359 = vmatpush2.msra.mxu0 0.0
    %360 = vmatprep.subr.mxu0 0.0
    %361 = vmatpush2.msra.mxu0 0.0
    %362 = vmatprep.mubr.f32.mxu0 0.0
    %363 = vmatmul.mubr.f32.gmra.mxu0 %v296
    %v364 = vpop.f32.mrf.mxu0
    %v365 = vadd.f32 0.0, %v364
    %v366 = vpop.f32.mrf.mxu0
    %367 = vdwg.mxu0
    %v368 = vrcp.pop %v365
    %v369 = vmul.f32 %v294, %v368
    %v370 = vld [vmem:[#allocation7] sm:$0xff]
    %v371 = vld [vmem:[#allocation7 + $0x8] sm:$0xff]
    %v373 = vsel %vm250, %v369, 0
    %375 = vmatprep.subr.mxu0 0.0
    %376 = vmatpush1.msra.mxu0 0.0
    %377 = vmatprep.subr.mxu0 0.0
    %378 = vmatpush1.msra.mxu0 0.0
    %379 = vmatprep.subr.mxu0 0.0
    %380 = vmatpush1.msra.mxu0 0.0
    %381 = vmatprep.subr.mxu0 0.0
    %382 = vmatpush1.msra.mxu0 0.0
    %383 = vmatprep.subr.mxu0 0.0
    %384 = vmatpush1.msra.mxu0 0.0
    %385 = vmatprep.subr.mxu0 0.0
    %386 = vmatpush1.msra.mxu0 0.0
    %387 = vmatprep.subr.mxu0 0.0
    %388 = vmatpush1.msra.mxu0 0.0
    %389 = vmatprep.subr.mxu0 0.0
    %390 = vmatpush1.msra.mxu0 0.0
    %391 = vmatprep.subr.mxu0 0.0
    %392 = vmatpush1.msra.mxu0 0.0
    %393 = vmatprep.subr.mxu0 0.0
    %394 = vmatpush1.msra.mxu0 0.0
    %395 = vmatprep.subr.mxu0 0.0
    %396 = vmatpush1.msra.mxu0 0.0
    %397 = vmatprep.subr.mxu0 0.0
    %398 = vmatpush1.msra.mxu0 0.0
    %399 = vmatprep.subr.mxu0 0.0
    %400 = vmatpush1.msra.mxu0 0.0
    %401 = vmatprep.subr.mxu0 0.0
    %402 = vmatpush1.msra.mxu0 0.0
    %403 = vmatprep.subr.mxu0 0.0
    %404 = vmatpush1.msra.mxu0 %v371
    %405 = vmatprep.subr.mxu0 0.0
    %406 = vmatpush1.msra.mxu0 %v370
    %407 = vmatprep.subr.mxu0 0.0
    %408 = vmatpush2.msra.mxu0 0.0
    %409 = vmatprep.subr.mxu0 0.0
    %410 = vmatpush2.msra.mxu0 0.0
    %411 = vmatprep.subr.mxu0 0.0
    %412 = vmatpush2.msra.mxu0 0.0
    %413 = vmatprep.subr.mxu0 0.0
    %414 = vmatpush2.msra.mxu0 0.0
    %415 = vmatprep.subr.mxu0 0.0
    %416 = vmatpush2.msra.mxu0 0.0
    %417 = vmatprep.subr.mxu0 0.0
    %418 = vmatpush2.msra.mxu0 0.0
    %419 = vmatprep.subr.mxu0 0.0
    %420 = vmatpush2.msra.mxu0 0.0
    %421 = vmatprep.subr.mxu0 0.0
    %422 = vmatpush2.msra.mxu0 0.0
    %423 = vmatprep.subr.mxu0 0.0
    %424 = vmatpush2.msra.mxu0 0.0
    %425 = vmatprep.subr.mxu0 0.0
    %426 = vmatpush2.msra.mxu0 0.0
    %427 = vmatprep.subr.mxu0 0.0
    %428 = vmatpush2.msra.mxu0 0.0
    %429 = vmatprep.subr.mxu0 0.0
    %430 = vmatpush2.msra.mxu0 0.0
    %431 = vmatprep.subr.mxu0 0.0
    %432 = vmatpush2.msra.mxu0 0.0
    %433 = vmatprep.subr.mxu0 0.0
    %434 = vmatpush2.msra.mxu0 0.0
    %435 = vmatprep.subr.mxu0 0.0
    %436 = vmatpush2.msra.mxu0 0.0
    %437 = vmatprep.subr.mxu0 0.0
    %438 = vmatpush2.msra.mxu0 0.0
    %439 = vmatprep.mubr.f32.mxu0 0.0
    %440 = vmatmul.mubr.f32.gmra.mxu0 %v373
    %v441 = vpop.f32.mrf.mxu0
    %v442 = vadd.f32 0.0, %v441
    %v443 = vpop.f32.mrf.mxu0
    %444 = vdwg.mxu0
    %v445 = vld [vmem:[#allocation5] sm:$0x3]
    %v446 = vmul.f32 %v442, %v445
    %v447 = vld [vmem:[#allocation8] sm:$0xff]
    %v448 = vld [vmem:[#allocation8 + $0x8] sm:$0xff]
    %v449 = vld [vmem:[#allocation8 + $0x10] sm:$0xff]
    %v450 = vld [vmem:[#allocation8 + $0x18] sm:$0xff]
    %v451 = vld [vmem:[#allocation8 + $0x20] sm:$0xff]
    %v452 = vld [vmem:[#allocation8 + $0x28] sm:$0xff]
    %v453 = vld [vmem:[#allocation8 + $0x30] sm:$0xff]
    %v454 = vld [vmem:[#allocation8 + $0x38] sm:$0xff]
    %v455 = vld [vmem:[#allocation11] sm:$0xff]
    %v456 = vld [vmem:[#allocation11 + $0x8] sm:$0xff]
    %457 = vmatprep.subr.mxu0 0.0
    %458 = vmatpush1.msra.mxu0 0.0
    %459 = vmatprep.subr.mxu0 0.0
    %460 = vmatpush1.msra.mxu0 0.0
    %461 = vmatprep.subr.mxu0 0.0
    %462 = vmatpush1.msra.mxu0 0.0
    %463 = vmatprep.subr.mxu0 0.0
    %464 = vmatpush1.msra.mxu0 0.0
    %465 = vmatprep.subr.mxu0 0.0
    %466 = vmatpush1.msra.mxu0 0.0
    %467 = vmatprep.subr.mxu0 0.0
    %468 = vmatpush1.msra.mxu0 0.0
    %469 = vmatprep.subr.mxu0 0.0
    %470 = vmatpush1.msra.mxu0 0.0
    %471 = vmatprep.subr.mxu0 0.0
    %472 = vmatpush1.msra.mxu0 0.0
    %473 = vmatprep.subr.mxu0 0.0
    %474 = vmatpush1.msra.mxu0 0.0
    %475 = vmatprep.subr.mxu0 0.0
    %476 = vmatpush1.msra.mxu0 0.0
    %477 = vmatprep.subr.mxu0 0.0
    %478 = vmatpush1.msra.mxu0 0.0
    %479 = vmatprep.subr.mxu0 0.0
    %480 = vmatpush1.msra.mxu0 0.0
    %481 = vmatprep.subr.mxu0 0.0
    %482 = vmatpush1.msra.mxu0 0.0
    %483 = vmatprep.subr.mxu0 0.0
    %484 = vmatpush1.msra.mxu0 0.0
    %485 = vmatprep.subr.mxu0 0.0
    %486 = vmatpush1.msra.mxu0 %v456
    %487 = vmatprep.subr.mxu0 0.0
    %488 = vmatpush1.msra.mxu0 %v455
    %489 = vmatprep.subr.mxu0 0.0
    %490 = vmatpush2.msra.mxu0 0.0
    %491 = vmatprep.subr.mxu0 0.0
    %492 = vmatpush2.msra.mxu0 0.0
    %493 = vmatprep.subr.mxu0 0.0
    %494 = vmatpush2.msra.mxu0 0.0
    %495 = vmatprep.subr.mxu0 0.0
    %496 = vmatpush2.msra.mxu0 0.0
    %497 = vmatprep.subr.mxu0 0.0
    %498 = vmatpush2.msra.mxu0 0.0
    %499 = vmatprep.subr.mxu0 0.0
    %500 = vmatpush2.msra.mxu0 0.0
    %501 = vmatprep.subr.mxu0 0.0
    %502 = vmatpush2.msra.mxu0 0.0
    %503 = vmatprep.subr.mxu0 0.0
    %504 = vmatpush2.msra.mxu0 0.0
    %505 = vmatprep.subr.mxu0 0.0
    %506 = vmatpush2.msra.mxu0 0.0
    %507 = vmatprep.subr.mxu0 0.0
    %508 = vmatpush2.msra.mxu0 0.0
    %509 = vmatprep.subr.mxu0 0.0
    %510 = vmatpush2.msra.mxu0 0.0
    %511 = vmatprep.subr.mxu0 0.0
    %512 = vmatpush2.msra.mxu0 0.0
    %513 = vmatprep.subr.mxu0 0.0
    %514 = vmatpush2.msra.mxu0 0.0
    %515 = vmatprep.subr.mxu0 0.0
    %516 = vmatpush2.msra.mxu0 0.0
    %517 = vmatprep.subr.mxu0 0.0
    %518 = vmatpush2.msra.mxu0 0.0
    %519 = vmatprep.subr.mxu0 0.0
    %520 = vmatpush2.msra.mxu0 0.0
    %521 = vmatprep.mubr.f32.mxu0 0.0
    %522 = vmatmul.mubr.f32.gmra.mxu0 %v373
    %v523 = vpop.f32.mrf.mxu0
    %v524 = vadd.f32 0.0, %v523
    %v525 = vpop.f32.mrf.mxu0
    %526 = vdwg.mxu0
    %vm527 = vcmask 523264
    %v529 = vsel %vm527, %v446, 0
    %531 = vmatprep.subr.mxu0 0.0
    %532 = vmatpush1.msra.mxu0 0.0
    %533 = vmatprep.subr.mxu0 0.0
    %534 = vmatpush1.msra.mxu0 0.0
    %535 = vmatprep.subr.mxu0 0.0
    %536 = vmatpush1.msra.mxu0 0.0
    %537 = vmatprep.subr.mxu0 0.0
    %538 = vmatpush1.msra.mxu0 0.0
    %539 = vmatprep.subr.mxu0 0.0
    %540 = vmatpush1.msra.mxu0 0.0
    %541 = vmatprep.subr.mxu0 0.0
    %542 = vmatpush1.msra.mxu0 0.0
    %543 = vmatprep.subr.mxu0 0.0
    %544 = vmatpush1.msra.mxu0 0.0
    %545 = vmatprep.subr.mxu0 0.0
    %546 = vmatpush1.msra.mxu0 0.0
    %547 = vmatprep.subr.mxu0 0.0
    %548 = vmatpush1.msra.mxu0 %v454
    %549 = vmatprep.subr.mxu0 0.0
    %550 = vmatpush1.msra.mxu0 %v453
    %551 = vmatprep.subr.mxu0 0.0
    %552 = vmatpush1.msra.mxu0 %v452
    %553 = vmatprep.subr.mxu0 0.0
    %554 = vmatpush1.msra.mxu0 %v451
    %555 = vmatprep.subr.mxu0 0.0
    %556 = vmatpush1.msra.mxu0 %v450
    %557 = vmatprep.subr.mxu0 0.0
    %558 = vmatpush1.msra.mxu0 %v449
    %559 = vmatprep.subr.mxu0 0.0
    %560 = vmatpush1.msra.mxu0 %v448
    %561 = vmatprep.subr.mxu0 0.0
    %562 = vmatpush1.msra.mxu0 %v447
    %563 = vmatprep.subr.mxu0 0.0
    %564 = vmatpush2.msra.mxu0 0.0
    %565 = vmatprep.subr.mxu0 0.0
    %566 = vmatpush2.msra.mxu0 0.0
    %567 = vmatprep.subr.mxu0 0.0
    %568 = vmatpush2.msra.mxu0 0.0
    %569 = vmatprep.subr.mxu0 0.0
    %570 = vmatpush2.msra.mxu0 0.0
    %571 = vmatprep.subr.mxu0 0.0
    %572 = vmatpush2.msra.mxu0 0.0
    %573 = vmatprep.subr.mxu0 0.0
    %574 = vmatpush2.msra.mxu0 0.0
    %575 = vmatprep.subr.mxu0 0.0
    %576 = vmatpush2.msra.mxu0 0.0
    %577 = vmatprep.subr.mxu0 0.0
    %578 = vmatpush2.msra.mxu0 0.0
    %579 = vmatprep.subr.mxu0 0.0
    %580 = vmatpush2.msra.mxu0 0.0
    %581 = vmatprep.subr.mxu0 0.0
    %582 = vmatpush2.msra.mxu0 0.0
    %583 = vmatprep.subr.mxu0 0.0
    %584 = vmatpush2.msra.mxu0 0.0
    %585 = vmatprep.subr.mxu0 0.0
    %586 = vmatpush2.msra.mxu0 0.0
    %587 = vmatprep.subr.mxu0 0.0
    %588 = vmatpush2.msra.mxu0 0.0
    %589 = vmatprep.subr.mxu0 0.0
    %590 = vmatpush2.msra.mxu0 0.0
    %591 = vmatprep.subr.mxu0 0.0
    %592 = vmatpush2.msra.mxu0 0.0
    %593 = vmatprep.subr.mxu0 0.0
    %594 = vmatpush2.msra.mxu0 0.0
    %595 = vmatprep.mubr.f32.mxu0 0.0
    %596 = vmatmul.mubr.f32.gmra.mxu0 %v529
    %v597 = vpop.f32.mrf.mxu0
    %v598 = vadd.f32 %v524, %v597
    %v599 = vpop.f32.mrf.mxu0
    %600 = vdwg.mxu0
    %v601 = vld [vmem:[%s5] sm:$0xff]
    %v602 = vld [vmem:[%s5 + $0x8] sm:$0xff]
    %v603 = vld [vmem:[%s5 + $0x10] sm:$0xff]
    %v604 = vld [vmem:[%s5 + $0x18] sm:$0xff]
    %v605 = vld [vmem:[%s5 + $0x20] sm:$0xff]
    %v606 = vld [vmem:[%s5 + $0x28] sm:$0xff]
    %v607 = vld [vmem:[%s5 + $0x30] sm:$0xff]
    %v608 = vld [vmem:[%s5 + $0x38] sm:$0xff]
    %v610 = vsel %vm527, %v598, 0
    %612 = vmatprep.subr.mxu0 0.0
    %613 = vmatpush1.msra.mxu0 0.0
    %614 = vmatprep.subr.mxu0 0.0
    %615 = vmatpush1.msra.mxu0 0.0
    %616 = vmatprep.subr.mxu0 0.0
    %617 = vmatpush1.msra.mxu0 0.0
    %618 = vmatprep.subr.mxu0 0.0
    %619 = vmatpush1.msra.mxu0 0.0
    %620 = vmatprep.subr.mxu0 0.0
    %621 = vmatpush1.msra.mxu0 0.0
    %622 = vmatprep.subr.mxu0 0.0
    %623 = vmatpush1.msra.mxu0 0.0
    %624 = vmatprep.subr.mxu0 0.0
    %625 = vmatpush1.msra.mxu0 0.0
    %626 = vmatprep.subr.mxu0 0.0
    %627 = vmatpush1.msra.mxu0 0.0
    %628 = vmatprep.subr.mxu0 0.0
    %629 = vmatpush1.msra.mxu0 %v608
    %630 = vmatprep.subr.mxu0 0.0
    %631 = vmatpush1.msra.mxu0 %v607
    %632 = vmatprep.subr.mxu0 0.0
    %633 = vmatpush1.msra.mxu0 %v606
    %634 = vmatprep.subr.mxu0 0.0
    %635 = vmatpush1.msra.mxu0 %v605
    %636 = vmatprep.subr.mxu0 0.0
    %637 = vmatpush1.msra.mxu0 %v604
    %638 = vmatprep.subr.mxu0 0.0
    %639 = vmatpush1.msra.mxu0 %v603
    %640 = vmatprep.subr.mxu0 0.0
    %641 = vmatpush1.msra.mxu0 %v602
    %642 = vmatprep.subr.mxu0 0.0
    %643 = vmatpush1.msra.mxu0 %v601
    %644 = vmatprep.subr.mxu0 0.0
    %645 = vmatpush2.msra.mxu0 0.0
    %646 = vmatprep.subr.mxu0 0.0
    %647 = vmatpush2.msra.mxu0 0.0
    %648 = vmatprep.subr.mxu0 0.0
    %649 = vmatpush2.msra.mxu0 0.0
    %650 = vmatprep.subr.mxu0 0.0
    %651 = vmatpush2.msra.mxu0 0.0
    %652 = vmatprep.subr.mxu0 0.0
    %653 = vmatpush2.msra.mxu0 0.0
    %654 = vmatprep.subr.mxu0 0.0
    %655 = vmatpush2.msra.mxu0 0.0
    %656 = vmatprep.subr.mxu0 0.0
    %657 = vmatpush2.msra.mxu0 0.0
    %658 = vmatprep.subr.mxu0 0.0
    %659 = vmatpush2.msra.mxu0 0.0
    %660 = vmatprep.subr.mxu0 0.0
    %661 = vmatpush2.msra.mxu0 0.0
    %662 = vmatprep.subr.mxu0 0.0
    %663 = vmatpush2.msra.mxu0 0.0
    %664 = vmatprep.subr.mxu0 0.0
    %665 = vmatpush2.msra.mxu0 0.0
    %666 = vmatprep.subr.mxu0 0.0
    %667 = vmatpush2.msra.mxu0 0.0
    %668 = vmatprep.subr.mxu0 0.0
    %669 = vmatpush2.msra.mxu0 0.0
    %670 = vmatprep.subr.mxu0 0.0
    %671 = vmatpush2.msra.mxu0 0.0
    %672 = vmatprep.subr.mxu0 0.0
    %673 = vmatpush2.msra.mxu0 0.0
    %674 = vmatprep.subr.mxu0 0.0
    %675 = vmatpush2.msra.mxu0 0.0
    %676 = vmatprep.mubr.f32.mxu0 0.0
    %677 = vmatmul.mubr.f32.gmra.mxu0 %v610
    %v678 = vpop.f32.mrf.mxu0
    %v679 = vadd.f32 0.0, %v678
    %v680 = vpop.f32.mrf.mxu0
    %681 = vdwg.mxu0
    %v682 = vsub.f32 %v598, %v679
    %v683 = vmul.f32 %v682, %v682
    %v685 = vsel %vm527, %v683, 0
    %687 = vmatprep.subr.mxu0 0.0
    %688 = vmatpush1.msra.mxu0 0.0
    %689 = vmatprep.subr.mxu0 0.0
    %690 = vmatpush1.msra.mxu0 0.0
    %691 = vmatprep.subr.mxu0 0.0
    %692 = vmatpush1.msra.mxu0 0.0
    %693 = vmatprep.subr.mxu0 0.0
    %694 = vmatpush1.msra.mxu0 0.0
    %695 = vmatprep.subr.mxu0 0.0
    %696 = vmatpush1.msra.mxu0 0.0
    %697 = vmatprep.subr.mxu0 0.0
    %698 = vmatpush1.msra.mxu0 0.0
    %699 = vmatprep.subr.mxu0 0.0
    %700 = vmatpush1.msra.mxu0 0.0
    %701 = vmatprep.subr.mxu0 0.0
    %702 = vmatpush1.msra.mxu0 0.0
    %703 = vmatprep.subr.mxu0 0.0
    %704 = vmatpush1.msra.mxu0 %v608
    %705 = vmatprep.subr.mxu0 0.0
    %706 = vmatpush1.msra.mxu0 %v607
    %707 = vmatprep.subr.mxu0 0.0
    %708 = vmatpush1.msra.mxu0 %v606
    %709 = vmatprep.subr.mxu0 0.0
    %710 = vmatpush1.msra.mxu0 %v605
    %711 = vmatprep.subr.mxu0 0.0
    %712 = vmatpush1.msra.mxu0 %v604
    %713 = vmatprep.subr.mxu0 0.0
    %714 = vmatpush1.msra.mxu0 %v603
    %715 = vmatprep.subr.mxu0 0.0
    %716 = vmatpush1.msra.mxu0 %v602
    %717 = vmatprep.subr.mxu0 0.0
    %718 = vmatpush1.msra.mxu0 %v601
    %719 = vmatprep.subr.mxu0 0.0
    %720 = vmatpush2.msra.mxu0 0.0
    %721 = vmatprep.subr.mxu0 0.0
    %722 = vmatpush2.msra.mxu0 0.0
    %723 = vmatprep.subr.mxu0 0.0
    %724 = vmatpush2.msra.mxu0 0.0
    %725 = vmatprep.subr.mxu0 0.0
    %726 = vmatpush2.msra.mxu0 0.0
    %727 = vmatprep.subr.mxu0 0.0
    %728 = vmatpush2.msra.mxu0 0.0
    %729 = vmatprep.subr.mxu0 0.0
    %730 = vmatpush2.msra.mxu0 0.0
    %731 = vmatprep.subr.mxu0 0.0
    %732 = vmatpush2.msra.mxu0 0.0
    %733 = vmatprep.subr.mxu0 0.0
    %734 = vmatpush2.msra.mxu0 0.0
    %735 = vmatprep.subr.mxu0 0.0
    %736 = vmatpush2.msra.mxu0 0.0
    %737 = vmatprep.subr.mxu0 0.0
    %738 = vmatpush2.msra.mxu0 0.0
    %739 = vmatprep.subr.mxu0 0.0
    %740 = vmatpush2.msra.mxu0 0.0
    %741 = vmatprep.subr.mxu0 0.0
    %742 = vmatpush2.msra.mxu0 0.0
    %743 = vmatprep.subr.mxu0 0.0
    %744 = vmatpush2.msra.mxu0 0.0
    %745 = vmatprep.subr.mxu0 0.0
    %746 = vmatpush2.msra.mxu0 0.0
    %747 = vmatprep.subr.mxu0 0.0
    %748 = vmatpush2.msra.mxu0 0.0
    %749 = vmatprep.subr.mxu0 0.0
    %750 = vmatpush2.msra.mxu0 0.0
    %751 = vmatprep.mubr.f32.mxu0 0.0
    %752 = vmatmul.mubr.f32.gmra.mxu0 %v685
    %v753 = vpop.f32.mrf.mxu0
    %v754 = vadd.f32 1e-05, %v753
    %v755 = vpop.f32.mrf.mxu0
    %756 = vdwg.mxu0
    %v757 = vrsqrt.pop %v754
    %v758 = vmul.f32 %v682, %v757
    %v759 = vld [vmem:[#allocation13] sm:$0xff]
    %v760 = vld [vmem:[#allocation13 + $0x8] sm:$0xff]
    %v761 = vld [vmem:[#allocation13 + $0x10] sm:$0xff]
    %v762 = vld [vmem:[#allocation13 + $0x18] sm:$0xff]
    %v763 = vld [vmem:[#allocation13 + $0x20] sm:$0xff]
    %v764 = vld [vmem:[#allocation13 + $0x28] sm:$0xff]
    %v765 = vld [vmem:[#allocation13 + $0x30] sm:$0xff]
    %v766 = vld [vmem:[#allocation13 + $0x38] sm:$0xff]
    %v767 = vld [vmem:[%s9] sm:$0x1]
    %v769 = vlaneseq
    %v770 = vshrl.u32 %v769, 7
    %v771 = vsub.s32 0, %v770
    %v772 = vrot.slane %v767, %v771
    %v775 = vsel %vm527, %v758, 0
    %777 = vmatprep.subr.mxu0 0.0
    %778 = vmatpush1.msra.mxu0 0.0
    %779 = vmatprep.subr.mxu0 0.0
    %780 = vmatpush1.msra.mxu0 0.0
    %781 = vmatprep.subr.mxu0 0.0
    %782 = vmatpush1.msra.mxu0 0.0
    %783 = vmatprep.subr.mxu0 0.0
    %784 = vmatpush1.msra.mxu0 0.0
    %785 = vmatprep.subr.mxu0 0.0
    %786 = vmatpush1.msra.mxu0 0.0
    %787 = vmatprep.subr.mxu0 0.0
    %788 = vmatpush1.msra.mxu0 0.0
    %789 = vmatprep.subr.mxu0 0.0
    %790 = vmatpush1.msra.mxu0 0.0
    %791 = vmatprep.subr.mxu0 0.0
    %792 = vmatpush1.msra.mxu0 0.0
    %793 = vmatprep.subr.mxu0 0.0
    %794 = vmatpush1.msra.mxu0 %v766
    %795 = vmatprep.subr.mxu0 0.0
    %796 = vmatpush1.msra.mxu0 %v765
    %797 = vmatprep.subr.mxu0 0.0
    %798 = vmatpush1.msra.mxu0 %v764
    %799 = vmatprep.subr.mxu0 0.0
    %800 = vmatpush1.msra.mxu0 %v763
    %801 = vmatprep.subr.mxu0 0.0
    %802 = vmatpush1.msra.mxu0 %v762
    %803 = vmatprep.subr.mxu0 0.0
    %804 = vmatpush1.msra.mxu0 %v761
    %805 = vmatprep.subr.mxu0 0.0
    %806 = vmatpush1.msra.mxu0 %v760
    %807 = vmatprep.subr.mxu0 0.0
    %808 = vmatpush1.msra.mxu0 %v759
    %809 = vmatprep.subr.mxu0 0.0
    %810 = vmatpush2.msra.mxu0 0.0
    %811 = vmatprep.subr.mxu0 0.0
    %812 = vmatpush2.msra.mxu0 0.0
    %813 = vmatprep.subr.mxu0 0.0
    %814 = vmatpush2.msra.mxu0 0.0
    %815 = vmatprep.subr.mxu0 0.0
    %816 = vmatpush2.msra.mxu0 0.0
    %817 = vmatprep.subr.mxu0 0.0
    %818 = vmatpush2.msra.mxu0 0.0
    %819 = vmatprep.subr.mxu0 0.0
    %820 = vmatpush2.msra.mxu0 0.0
    %821 = vmatprep.subr.mxu0 0.0
    %822 = vmatpush2.msra.mxu0 0.0
    %823 = vmatprep.subr.mxu0 0.0
    %824 = vmatpush2.msra.mxu0 0.0
    %825 = vmatprep.subr.mxu0 0.0
    %826 = vmatpush2.msra.mxu0 0.0
    %827 = vmatprep.subr.mxu0 0.0
    %828 = vmatpush2.msra.mxu0 0.0
    %829 = vmatprep.subr.mxu0 0.0
    %830 = vmatpush2.msra.mxu0 0.0
    %831 = vmatprep.subr.mxu0 0.0
    %832 = vmatpush2.msra.mxu0 0.0
    %833 = vmatprep.subr.mxu0 0.0
    %834 = vmatpush2.msra.mxu0 0.0
    %835 = vmatprep.subr.mxu0 0.0
    %836 = vmatpush2.msra.mxu0 0.0
    %837 = vmatprep.subr.mxu0 0.0
    %838 = vmatpush2.msra.mxu0 0.0
    %839 = vmatprep.subr.mxu0 0.0
    %840 = vmatpush2.msra.mxu0 0.0
    %841 = vmatprep.mubr.f32.mxu0 0.0
    %842 = vmatmul.mubr.f32.gmra.mxu0 %v775
    %v843 = vpop.f32.mrf.mxu0
    %v844 = vadd.f32 %v772, %v843
    %v845 = vpop.f32.mrf.mxu0
    %846 = vdwg.mxu0
    %847 = vst [vmem:[#allocation14] sm:$0x3] %v844
    // Predicated region
    $region70: #{tpu_custom_call.1} parent=1 // pred_check
      _
    $region71: #{tpu_custom_call.1} parent=1 // pred_check_branch
      %849 = sbr.rel (0) target = $region73
    $region72: #{tpu_custom_call.1} parent=1 // pred_region
      %s851 = ssub.s32 32, 32
      %852 = vsyncadd [#allocation4], %s851
      %s854 = sshll.u32 [#allocation14], 4
      %s855 = int_to_ptr.vmem [resolvable:$true] %s854
      %857 = dma.vmem_to_hbm [thread:$0]  %s855, 32, %s10, [#allocation4]
    $region73: #{tpu_custom_call.1} parent=1 // pred_fallthru
      _
    // Predicated region
    $region74: #{tpu_custom_call.1} parent=1 // pred_check
      _
    $region75: #{tpu_custom_call.1} parent=1 // pred_check_branch
      %859 = sbr.rel (0) target = $region77
    $region76: #{tpu_custom_call.1} parent=1 // pred_region
      %860 = dma.done [#allocation4], 32
    $region77: #{tpu_custom_call.1} parent=1 // pred_fallthru
      _
    %861 = vsyncpa [#allocation3], 1
    %862 = vsyncpa [#allocation6], 1
    %863 = vsyncpa [#allocation9], 1
    %864 = vsyncpa [#allocation12], 1
    %865 = vsyncpa [#allocation4], 1

</llo_original>
